<compile_context>
chip_gen: v7x
topology: tpu7x:2x2x1
jax: 0.10.0
libtpu: 0.0.40
codegen_flags: <defaults>
</compile_context>

<pallas_src>
import jax
import jax.numpy as jnp
from jax.experimental import pallas as pl
from jax.experimental.pallas import tpu as pltpu


def _round_up(n, m):
    return ((n + m - 1) // m) * m


def mine_kernel(x_ref, w1_ref, w2_ref, w3_ref, b_ref, o_ref):
    """One batch tile. x_ref: (in_dim, tB), weights in torch (out, in) layout."""
    x = x_ref[...]                       # (in_dim, tB)  batch on lanes
    b1 = b_ref[:, 0:1]                   # (H, 1)
    b2 = b_ref[:, 1:2]                   # (H, 1)
    b3 = b_ref[0:1, 2:3]                 # (1, 1)

    # dense1 + ReLU on the MXU (MXU is nearly idle here, padding waste is free).
    h1 = jnp.dot(w1_ref[...], x, preferred_element_type=jnp.float32) + b1
    h1 = jnp.maximum(h1, 0.0)            # (H, tB)

    # dense2 + ReLU on the MXU.
    h2 = jnp.dot(w2_ref[...], h1, preferred_element_type=jnp.float32) + b2
    h2 = jnp.maximum(h2, 0.0)            # (H, tB)

    # dense3 (N = 1) on the MXU -> naturally lane-dense (1, tB) output row.
    out = jnp.dot(w3_ref[...], h2, preferred_element_type=jnp.float32) + b3
    o_ref[...] = out.astype(o_ref.dtype)


def _pack_bias(params):
    """Pack b1, b2, b3 into one small VMEM-resident (hidden, 3) f32 operand."""
    hidden = params["w1"].shape[0]
    bias = jnp.zeros((hidden, 3), jnp.float32)
    bias = bias.at[:, 0].set(params["b1"])
    bias = bias.at[:, 1].set(params["b2"])
    bias = bias.at[0, 2].set(params["b3"][0])
    return bias


def _pick_tiling(B, max_tile_b):
    """Adaptive batch tile: amortize per-grid-step overhead, bound pad waste."""
    max_tile_b = max(128, _round_up(max_tile_b, 128))
    n_tiles = max(1, pl.cdiv(B, max_tile_b))
    # With dimension_semantics=("parallel",) the grid is sharded across v7x's
    # two TensorCores; keep >= 2 tiles once the batch is big enough so neither
    # core sits idle (negligible cost on single-core v5e/v6e).
    if n_tiles == 1 and B >= 256:
        n_tiles = 2
    tB = _round_up(pl.cdiv(B, n_tiles), 128)
    return tB, n_tiles


def mine_forward_t(x_t, params, *, max_tile_b=32768):
    """Primary entry point. x_t: (in_dim, B) float32 (batch on the lane axis).

    Returns (B, 1) float32.
    """
    w1, w2, w3 = params["w1"], params["w2"], params["w3"]
    hidden, in_dim = w1.shape
    assert x_t.shape[0] == in_dim, (x_t.shape, in_dim)
    B = x_t.shape[1]

    bias = _pack_bias(params)
    tB, n_tiles = _pick_tiling(B, max_tile_b)
    B_pad = n_tiles * tB

    if B_pad != B:
        # Zero-pad the lane axis only up to the grid coverage; padded columns
        # compute harmless garbage that is sliced off below.
        x_t = jnp.pad(x_t, ((0, 0), (0, B_pad - B)))

    out_pad = pl.pallas_call(
        mine_kernel,
        out_shape=jax.ShapeDtypeStruct((1, B_pad), jnp.float32),
        grid=(n_tiles,),
        in_specs=[
            pl.BlockSpec((in_dim, tB), lambda i: (0, i)),   # x tile, pipelined
            pl.BlockSpec(w1.shape, lambda i: (0, 0)),       # VMEM-resident
            pl.BlockSpec(w2.shape, lambda i: (0, 0)),       # VMEM-resident
            pl.BlockSpec(w3.shape, lambda i: (0, 0)),       # VMEM-resident
            pl.BlockSpec(bias.shape, lambda i: (0, 0)),     # VMEM-resident
        ],
        out_specs=pl.BlockSpec((1, tB), lambda i: (0, i)),  # lane-dense output
        compiler_params=pltpu.CompilerParams(
            dimension_semantics=("parallel",),              # megacore on v7x
        ),
    )(x_t, w1, w2, w3, bias)

    return out_pad[0, :B].reshape(B, 1)


def mine_forward(x, params, *, max_tile_b=32768):
    """Torch-convention entry point. x: (B, in_dim) float32 -> (B, 1)."""
    # TODO(synk): ideally the producer supplies x already as (in_dim, B) so this
    # transpose (an extra HBM read+write of x) disappears; use mine_forward_t.
    return mine_forward_t(x.T, params, max_tile_b=max_tile_b)


def init_params(key, in_dim=2, hidden_size=10):
    """Matches the PyTorch module: weights ~ Normal(0, 0.02) in torch
    (out_features, in_features) layout, biases zeroed."""
    k1, k2, k3 = jax.random.split(key, 3)
    w1 = 0.02 * jax.random.normal(k1, (hidden_size, in_dim), jnp.float32)
    w2 = 0.02 * jax.random.normal(k2, (hidden_size, hidden_size), jnp.float32)
    w3 = 0.02 * jax.random.normal(k3, (1, hidden_size), jnp.float32)
    b1 = jnp.zeros((hidden_size,), jnp.float32)
    b2 = jnp.zeros((hidden_size,), jnp.float32)
    b3 = jnp.zeros((1,), jnp.float32)
    return dict(w1=w1, b1=b1, w2=w2, b2=b2, w3=w3, b3=b3)


def mine_reference(x, p):
    """Pure-JAX reference (torch semantics: y = x @ W.T + b)."""
    h1 = jnp.maximum(x @ p["w1"].T + p["b1"], 0.0)
    h2 = jnp.maximum(h1 @ p["w2"].T + p["b2"], 0.0)
    return h2 @ p["w3"].T + p["b3"]


if __name__ == "__main__":
    key = jax.random.PRNGKey(0)
    kx, kx2, kx3, kp = jax.random.split(key, 4)

    B, in_dim, hidden = 8, 2, 10
    params = init_params(kp, in_dim=in_dim, hidden_size=hidden)

    # Small test (single tile, padded lane axis).
    x = jax.random.normal(kx, (B, in_dim), jnp.float32)
    out = jax.block_until_ready(mine_forward(x, params))
    ref = mine_reference(x, params)
    assert out.shape == (B, 1), out.shape
    assert jnp.allclose(out, ref, atol=1e-5, rtol=1e-5), (out, ref)

    # Multi-tile + ragged-batch test (exercises the batch grid and padding).
    B2 = 300
    x2 = jax.random.normal(kx2, (B2, in_dim), jnp.float32)
    out2 = jax.block_until_ready(mine_forward(x2, params, max_tile_b=128))
    ref2 = mine_reference(x2, params)
    assert out2.shape == (B2, 1), out2.shape
    assert jnp.allclose(out2, ref2, atol=1e-5, rtol=1e-5)

    # Pre-transposed entry point (no wrapper pad/transpose, >=2 tiles for v7x).
    B3 = 256
    x3 = jax.random.normal(kx3, (B3, in_dim), jnp.float32)
    out3 = jax.block_until_ready(mine_forward_t(x3.T, params))
    ref3 = mine_reference(x3, params)
    assert out3.shape == (B3, 1), out3.shape
    assert jnp.allclose(out3, ref3, atol=1e-5, rtol=1e-5)

    print("KERNEL_OK")
</pallas_src>

<mosaic_0001>
module attributes {stable_mosaic.version = 11 : i64} {
  func.func @mine_kernel(%arg0: i32, %arg1: memref<2x128xf32, #tpu.memory_space<vmem>>, %arg2: memref<10x2xf32, #tpu.memory_space<vmem>>, %arg3: memref<10x10xf32, #tpu.memory_space<vmem>>, %arg4: memref<1x10xf32, #tpu.memory_space<vmem>>, %arg5: memref<10x3xf32, #tpu.memory_space<vmem>>, %arg6: memref<1x128xf32, #tpu.memory_space<vmem>>) attributes {dimension_semantics = [#tpu.dimension_semantics<parallel>], iteration_bounds = array<i64: 1>, scalar_prefetch = 0 : i64, scratch_operands = 0 : i64, tpu.core_type = #tpu.core_type<tc>, window_params = [{transform_indices = @transform_0, window_bounds = array<i64: 2, 128>}, {pipeline_mode = #tpu.pipeline_mode<synchronous>, transform_indices = @transform_1, window_bounds = array<i64: 10, 2>}, {pipeline_mode = #tpu.pipeline_mode<synchronous>, transform_indices = @transform_2, window_bounds = array<i64: 10, 10>}, {pipeline_mode = #tpu.pipeline_mode<synchronous>, transform_indices = @transform_3, window_bounds = array<i64: 1, 10>}, {pipeline_mode = #tpu.pipeline_mode<synchronous>, transform_indices = @transform_4, window_bounds = array<i64: 10, 3>}, {transform_indices = @transform_5, window_bounds = array<i64: 1, 128>}]} {
    %c0 = arith.constant 0 : index
    %c0_0 = arith.constant 0 : index
    %0 = vector.load %arg1[%c0, %c0_0] : memref<2x128xf32, #tpu.memory_space<vmem>>, vector<2x128xf32>
    %c0_1 = arith.constant 0 : index
    %c0_2 = arith.constant 0 : index
    %1 = vector.load %arg5[%c0_1, %c0_2] : memref<10x3xf32, #tpu.memory_space<vmem>>, vector<10x1xf32>
    %c0_3 = arith.constant 0 : index
    %c1 = arith.constant 1 : index
    %2 = vector.load %arg5[%c0_3, %c1] : memref<10x3xf32, #tpu.memory_space<vmem>>, vector<10x1xf32>
    %c0_4 = arith.constant 0 : index
    %c2 = arith.constant 2 : index
    %3 = vector.load %arg5[%c0_4, %c2] : memref<10x3xf32, #tpu.memory_space<vmem>>, vector<1x1xf32>
    %c0_5 = arith.constant 0 : index
    %c0_6 = arith.constant 0 : index
    %4 = vector.load %arg2[%c0_5, %c0_6] : memref<10x2xf32, #tpu.memory_space<vmem>>, vector<10x2xf32>
    %cst = arith.constant dense<0.000000e+00> : vector<10x128xf32>
    %5 = tpu.matmul %4, %0, %cst {dimension_numbers = #tpu.dot_dimension_numbers<[1], [0], [0], [1], [0, 0, 1, 1], [], []>} : vector<10x2xf32>, vector<2x128xf32>, vector<10x128xf32> -> vector<10x128xf32>
    %6 = vector.broadcast %1 : vector<10x1xf32> to vector<10x128xf32>
    %7 = arith.addf %5, %6 : vector<10x128xf32>
    %cst_7 = arith.constant 0.000000e+00 : f32
    %8 = vector.broadcast %cst_7 : f32 to vector<10x128xf32>
    %9 = arith.maximumf %7, %8 : vector<10x128xf32>
    %c0_8 = arith.constant 0 : index
    %c0_9 = arith.constant 0 : index
    %10 = vector.load %arg3[%c0_8, %c0_9] : memref<10x10xf32, #tpu.memory_space<vmem>>, vector<10x10xf32>
    %cst_10 = arith.constant dense<0.000000e+00> : vector<10x128xf32>
    %11 = tpu.matmul %10, %9, %cst_10 {dimension_numbers = #tpu.dot_dimension_numbers<[1], [0], [0], [1], [0, 0, 1, 1], [], []>} : vector<10x10xf32>, vector<10x128xf32>, vector<10x128xf32> -> vector<10x128xf32>
    %12 = vector.broadcast %2 : vector<10x1xf32> to vector<10x128xf32>
    %13 = arith.addf %11, %12 : vector<10x128xf32>
    %cst_11 = arith.constant 0.000000e+00 : f32
    %14 = vector.broadcast %cst_11 : f32 to vector<10x128xf32>
    %15 = arith.maximumf %13, %14 : vector<10x128xf32>
    %c0_12 = arith.constant 0 : index
    %c0_13 = arith.constant 0 : index
    %16 = vector.load %arg4[%c0_12, %c0_13] : memref<1x10xf32, #tpu.memory_space<vmem>>, vector<1x10xf32>
    %cst_14 = arith.constant dense<0.000000e+00> : vector<1x128xf32>
    %17 = tpu.matmul %16, %15, %cst_14 {dimension_numbers = #tpu.dot_dimension_numbers<[1], [0], [0], [1], [0, 0, 1, 1], [], []>} : vector<1x10xf32>, vector<10x128xf32>, vector<1x128xf32> -> vector<1x128xf32>
    %18 = vector.broadcast %3 : vector<1x1xf32> to vector<1x128xf32>
    %19 = arith.addf %17, %18 : vector<1x128xf32>
    %c0_15 = arith.constant 0 : index
    %c0_16 = arith.constant 0 : index
    %20 = vector.load %arg6[%c0_15, %c0_16] : memref<1x128xf32, #tpu.memory_space<vmem>>, vector<1x128xf32>
    tpu.vector_store %arg6[%c0_15, %c0_16], %19 {strides = array<i32>} : memref<1x128xf32, #tpu.memory_space<vmem>>, vector<1x128xf32>,
    return
  }
  func.func @transform_0(%arg0: i32) -> (i32, i32) {
    %c0_i32 = arith.constant 0 : i32
    %c0_i32_0 = arith.constant 0 : i32
    return %c0_i32, %arg0 : i32, i32
  }
  func.func @transform_1(%arg0: i32) -> (i32, i32) {
    %c0_i32 = arith.constant 0 : i32
    %c0_i32_0 = arith.constant 0 : i32
    %c0_i32_1 = arith.constant 0 : i32
    return %c0_i32, %c0_i32_0 : i32, i32
  }
  func.func @transform_2(%arg0: i32) -> (i32, i32) {
    %c0_i32 = arith.constant 0 : i32
    %c0_i32_0 = arith.constant 0 : i32
    %c0_i32_1 = arith.constant 0 : i32
    return %c0_i32, %c0_i32_0 : i32, i32
  }
  func.func @transform_3(%arg0: i32) -> (i32, i32) {
    %c0_i32 = arith.constant 0 : i32
    %c0_i32_0 = arith.constant 0 : i32
    %c0_i32_1 = arith.constant 0 : i32
    return %c0_i32, %c0_i32_0 : i32, i32
  }
  func.func @transform_4(%arg0: i32) -> (i32, i32) {
    %c0_i32 = arith.constant 0 : i32
    %c0_i32_0 = arith.constant 0 : i32
    %c0_i32_1 = arith.constant 0 : i32
    return %c0_i32, %c0_i32_0 : i32, i32
  }
  func.func @transform_5(%arg0: i32) -> (i32, i32) {
    %c0_i32 = arith.constant 0 : i32
    %c0_i32_0 = arith.constant 0 : i32
    return %c0_i32, %arg0 : i32, i32
  }
}

</mosaic_0001>

<llo_original>
// kernel: tpu_custom_call.1
$region0: #{tpu_custom_call.1}
  #allocation0 [shape = 'u32[]', space=smem, size = 0x4, offset = 0x4, fixed_abs, tag = 'smem constant byte address 0x4 - core index']
  #allocation1 [shape = 'u32[144,128]{1,0:T(1,128)}', space=vmem, size = 0x12000, scoped, tag = 'internal scratch']
  %s0 = inlined_call_operand.vmem [shape: f32[2,128], index: 0, kind: input, shape index: {}]
  %s1 = inlined_call_operand.vmem [shape: f32[10,2], index: 1, kind: input, shape index: {}]
  %s2 = inlined_call_operand.vmem [shape: f32[10,10], index: 2, kind: input, shape index: {}]
  %s3 = inlined_call_operand.vmem [shape: f32[1,10], index: 3, kind: input, shape index: {}]
  %s4 = inlined_call_operand.vmem [shape: f32[10,3], index: 4, kind: input, shape index: {}]
  %s5 = inlined_call_operand.hbm [shape: f32[1,128], index: 5, kind: output, shape index: {}]
  %s6 = sld [smem:[#allocation0]]
  $region30: #{tpu_custom_call.1} parent=0
    _
  %s8 = ssub.s32 1, %s6
  %s9 = scalar_select 0, %s8, %s6
  $region1: #{tpu_custom_call.1} parent=0
    #allocation2 [shape = 'u8[512]{0}', space=vmem, size = 0x400, scoped, tag = 'output window, operand 0, single buffered']
    #allocation3 [shape = 's32[1]{0}', space=sflag, size = 0x4, scoped, tag = 'scoped memory for tpu_custom_call.1']
    %10 = vsyncpa [#allocation3], 0
    // Predicated region
    $region2: #{tpu_custom_call.1} parent=1 // pred_check
      _
    $region3: #{tpu_custom_call.1} parent=1 // pred_check_branch
      %12 = sbr.rel (0) target = $region5
    $region4: #{tpu_custom_call.1} parent=1 // pred_region
      _
    $region5: #{tpu_custom_call.1} parent=1 // pred_fallthru
      _
    // Predicated region
    $region6: #{tpu_custom_call.1} parent=1 // pred_check
      _
    $region7: #{tpu_custom_call.1} parent=1 // pred_check_branch
      %14 = sbr.rel (0) target = $region9
    $region8: #{tpu_custom_call.1} parent=1 // pred_region
      _
    $region9: #{tpu_custom_call.1} parent=1 // pred_fallthru
      _
    // Predicated region
    $region10: #{tpu_custom_call.1} parent=1 // pred_check
      _
    $region11: #{tpu_custom_call.1} parent=1 // pred_check_branch
      %16 = sbr.rel (0) target = $region13
    $region12: #{tpu_custom_call.1} parent=1 // pred_region
      _
    $region13: #{tpu_custom_call.1} parent=1 // pred_fallthru
      _
    // Predicated region
    $region14: #{tpu_custom_call.1} parent=1 // pred_check
      _
    $region15: #{tpu_custom_call.1} parent=1 // pred_check_branch
      %18 = sbr.rel (0) target = $region17
    $region16: #{tpu_custom_call.1} parent=1 // pred_region
      _
    $region17: #{tpu_custom_call.1} parent=1 // pred_fallthru
      _
    // Predicated region
    $region18: #{tpu_custom_call.1} parent=1 // pred_check
      _
    $region19: #{tpu_custom_call.1} parent=1 // pred_check_branch
      %20 = sbr.rel (0) target = $region21
    $region20: #{tpu_custom_call.1} parent=1 // pred_region
      _
    $region21: #{tpu_custom_call.1} parent=1 // pred_fallthru
      _
    %v21 = vld [vmem:[%s0] sm:$0x3]
    %v22 = vld [vmem:[%s4] sm:$0xff]
    %v23 = vld [vmem:[%s4 + $0x8] sm:$0x3]
    %v24 = vld [vmem:[%s4] sm:$0x1]
    %v25 = vld [vmem:[%s1] sm:$0xff]
    %v26 = vld [vmem:[%s1 + $0x8] sm:$0x3]
    %28 = vset.pattern.permute.xlu0 0
    %29 = vperm.xlu0 %28, %v22
    %v30 = vpop.permute.xlu0 %29
    %33 = vset.pattern.permute.xlu0 0
    %34 = vperm.xlu0 %33, %v23
    %v35 = vpop.permute.xlu0 %34
    %vm37 = vcmask 15360
    %v39 = vsel %vm37, %v25, 0
    %v42 = vsel %vm37, %v26, 0
    %vm44 = vcmask 1041408
    %v46 = vsel %vm44, %v21, 0
    %48 = vmatprep.subr.mxu0 0.0
    %49 = vmatpush1.msra.mxu0 %v46
    %50 = vmatprep.subr.mxu0 0.0
    %51 = vmatpush1.msra.mxu0 0.0
    %52 = vmatprep.subr.mxu0 0.0
    %53 = vmatpush1.msra.mxu0 0.0
    %54 = vmatprep.subr.mxu0 0.0
    %55 = vmatpush1.msra.mxu0 0.0
    %56 = vmatprep.subr.mxu0 0.0
    %57 = vmatpush1.msra.mxu0 0.0
    %58 = vmatprep.subr.mxu0 0.0
    %59 = vmatpush1.msra.mxu0 0.0
    %60 = vmatprep.subr.mxu0 0.0
    %61 = vmatpush1.msra.mxu0 0.0
    %62 = vmatprep.subr.mxu0 0.0
    %63 = vmatpush1.msra.mxu0 0.0
    %64 = vmatprep.subr.mxu0 0.0
    %65 = vmatpush1.msra.mxu0 0.0
    %66 = vmatprep.subr.mxu0 0.0
    %67 = vmatpush1.msra.mxu0 0.0
    %68 = vmatprep.subr.mxu0 0.0
    %69 = vmatpush1.msra.mxu0 0.0
    %70 = vmatprep.subr.mxu0 0.0
    %71 = vmatpush1.msra.mxu0 0.0
    %72 = vmatprep.subr.mxu0 0.0
    %73 = vmatpush1.msra.mxu0 0.0
    %74 = vmatprep.subr.mxu0 0.0
    %75 = vmatpush1.msra.mxu0 0.0
    %76 = vmatprep.subr.mxu0 0.0
    %77 = vmatpush1.msra.mxu0 0.0
    %78 = vmatprep.subr.mxu0 0.0
    %79 = vmatpush1.msra.mxu0 0.0
    %80 = vmatprep.subr.mxu0 0.0
    %81 = vmatpush1.msra.mxu0 0.0
    %82 = vmatprep.subr.mxu0 0.0
    %83 = vmatpush1.msra.mxu0 0.0
    %84 = vmatprep.subr.mxu0 0.0
    %85 = vmatpush1.msra.mxu0 0.0
    %86 = vmatprep.subr.mxu0 0.0
    %87 = vmatpush1.msra.mxu0 0.0
    %88 = vmatprep.subr.mxu0 0.0
    %89 = vmatpush1.msra.mxu0 0.0
    %90 = vmatprep.subr.mxu0 0.0
    %91 = vmatpush1.msra.mxu0 0.0
    %92 = vmatprep.subr.mxu0 0.0
    %93 = vmatpush1.msra.mxu0 0.0
    %94 = vmatprep.subr.mxu0 0.0
    %95 = vmatpush1.msra.mxu0 0.0
    %96 = vmatprep.subr.mxu0 0.0
    %97 = vmatpush1.msra.mxu0 0.0
    %98 = vmatprep.subr.mxu0 0.0
    %99 = vmatpush1.msra.mxu0 0.0
    %100 = vmatprep.subr.mxu0 0.0
    %101 = vmatpush1.msra.mxu0 0.0
    %102 = vmatprep.subr.mxu0 0.0
    %103 = vmatpush1.msra.mxu0 0.0
    %104 = vmatprep.subr.mxu0 0.0
    %105 = vmatpush1.msra.mxu0 0.0
    %106 = vmatprep.subr.mxu0 0.0
    %107 = vmatpush1.msra.mxu0 0.0
    %108 = vmatprep.subr.mxu0 0.0
    %109 = vmatpush1.msra.mxu0 0.0
    %110 = vmatprep.subr.mxu0 0.0
    %111 = vmatpush1.msra.mxu0 0.0
    %112 = vmatprep.mubr.f32.mxu0 0.0
    %113 = vmatmul.mubr.f32.gmra.mrb[0].mxu0 %v39
    %v114 = vpop.f32.mrb[0].mxu0
    %v115 = vadd.f32 %v30, %v114
    %v116 = vpop.f32.mrb[0].mxu0
    %117 = vmatprep.mubr.f32.mxu0 0.0
    %118 = vmatmul.mubr.f32.gmra.mrb[0].mxu0 %v42
    %v119 = vpop.f32.mrb[0].mxu0
    %v120 = vadd.f32 %v35, %v119
    %v121 = vpop.f32.mrb[0].mxu0
    %122 = vdwg.mxu0
    %v123 = vmax.f32 %v115, 0.0
    %v124 = vmax.f32 %v120, 0.0
    %v125 = vld [vmem:[%s2] sm:$0xff]
    %v126 = vld [vmem:[%s2 + $0x8] sm:$0x3]
    %127 = vset.pattern.permute.xlu0 1
    %128 = vperm.xlu0 %127, %v22
    %v129 = vpop.permute.xlu0 %128
    %131 = vset.pattern.permute.xlu0 1
    %132 = vperm.xlu0 %131, %v23
    %v133 = vpop.permute.xlu0 %132
    %vm135 = vcmask 80896
    %v137 = vsel %vm135, %v125, 0
    %v140 = vsel %vm135, %v126, 0
    %v143 = vsel %vm44, %v124, 0
    %145 = vmatprep.subr.mxu0 0.0
    %146 = vmatpush1.msra.mxu0 %v123
    %147 = vmatprep.subr.mxu0 0.0
    %148 = vmatpush1.msra.mxu0 %v143
    %149 = vmatprep.subr.mxu0 0.0
    %150 = vmatpush1.msra.mxu0 0.0
    %151 = vmatprep.subr.mxu0 0.0
    %152 = vmatpush1.msra.mxu0 0.0
    %153 = vmatprep.subr.mxu0 0.0
    %154 = vmatpush1.msra.mxu0 0.0
    %155 = vmatprep.subr.mxu0 0.0
    %156 = vmatpush1.msra.mxu0 0.0
    %157 = vmatprep.subr.mxu0 0.0
    %158 = vmatpush1.msra.mxu0 0.0
    %159 = vmatprep.subr.mxu0 0.0
    %160 = vmatpush1.msra.mxu0 0.0
    %161 = vmatprep.subr.mxu0 0.0
    %162 = vmatpush1.msra.mxu0 0.0
    %163 = vmatprep.subr.mxu0 0.0
    %164 = vmatpush1.msra.mxu0 0.0
    %165 = vmatprep.subr.mxu0 0.0
    %166 = vmatpush1.msra.mxu0 0.0
    %167 = vmatprep.subr.mxu0 0.0
    %168 = vmatpush1.msra.mxu0 0.0
    %169 = vmatprep.subr.mxu0 0.0
    %170 = vmatpush1.msra.mxu0 0.0
    %171 = vmatprep.subr.mxu0 0.0
    %172 = vmatpush1.msra.mxu0 0.0
    %173 = vmatprep.subr.mxu0 0.0
    %174 = vmatpush1.msra.mxu0 0.0
    %175 = vmatprep.subr.mxu0 0.0
    %176 = vmatpush1.msra.mxu0 0.0
    %177 = vmatprep.subr.mxu0 0.0
    %178 = vmatpush1.msra.mxu0 0.0
    %179 = vmatprep.subr.mxu0 0.0
    %180 = vmatpush1.msra.mxu0 0.0
    %181 = vmatprep.subr.mxu0 0.0
    %182 = vmatpush1.msra.mxu0 0.0
    %183 = vmatprep.subr.mxu0 0.0
    %184 = vmatpush1.msra.mxu0 0.0
    %185 = vmatprep.subr.mxu0 0.0
    %186 = vmatpush1.msra.mxu0 0.0
    %187 = vmatprep.subr.mxu0 0.0
    %188 = vmatpush1.msra.mxu0 0.0
    %189 = vmatprep.subr.mxu0 0.0
    %190 = vmatpush1.msra.mxu0 0.0
    %191 = vmatprep.subr.mxu0 0.0
    %192 = vmatpush1.msra.mxu0 0.0
    %193 = vmatprep.subr.mxu0 0.0
    %194 = vmatpush1.msra.mxu0 0.0
    %195 = vmatprep.subr.mxu0 0.0
    %196 = vmatpush1.msra.mxu0 0.0
    %197 = vmatprep.subr.mxu0 0.0
    %198 = vmatpush1.msra.mxu0 0.0
    %199 = vmatprep.subr.mxu0 0.0
    %200 = vmatpush1.msra.mxu0 0.0
    %201 = vmatprep.subr.mxu0 0.0
    %202 = vmatpush1.msra.mxu0 0.0
    %203 = vmatprep.subr.mxu0 0.0
    %204 = vmatpush1.msra.mxu0 0.0
    %205 = vmatprep.subr.mxu0 0.0
    %206 = vmatpush1.msra.mxu0 0.0
    %207 = vmatprep.subr.mxu0 0.0
    %208 = vmatpush1.msra.mxu0 0.0
    %209 = vmatprep.mubr.f32.mxu0 0.0
    %210 = vmatmul.mubr.f32.gmra.mrb[0].mxu0 %v137
    %v211 = vpop.f32.mrb[0].mxu0
    %v212 = vadd.f32 %v129, %v211
    %v213 = vpop.f32.mrb[0].mxu0
    %214 = vmatprep.mubr.f32.mxu0 0.0
    %215 = vmatmul.mubr.f32.gmra.mrb[0].mxu0 %v140
    %v216 = vpop.f32.mrb[0].mxu0
    %v217 = vadd.f32 %v133, %v216
    %v218 = vpop.f32.mrb[0].mxu0
    %219 = vdwg.mxu0
    %v220 = vmax.f32 %v212, 0.0
    %v221 = vmax.f32 %v217, 0.0
    %v222 = vld [vmem:[%s3] sm:$0x1]
    %224 = vset.pattern.permute.xlu0 2
    %225 = vperm.xlu0 %224, %v24
    %v226 = vpop.permute.xlu0 %225
    %v229 = vsel %vm135, %v222, 0
    %v232 = vsel %vm44, %v221, 0
    %234 = vmatprep.subr.mxu0 0.0
    %235 = vmatpush1.msra.mxu0 %v220
    %236 = vmatprep.subr.mxu0 0.0
    %237 = vmatpush1.msra.mxu0 %v232
    %238 = vmatprep.subr.mxu0 0.0
    %239 = vmatpush1.msra.mxu0 0.0
    %240 = vmatprep.subr.mxu0 0.0
    %241 = vmatpush1.msra.mxu0 0.0
    %242 = vmatprep.subr.mxu0 0.0
    %243 = vmatpush1.msra.mxu0 0.0
    %244 = vmatprep.subr.mxu0 0.0
    %245 = vmatpush1.msra.mxu0 0.0
    %246 = vmatprep.subr.mxu0 0.0
    %247 = vmatpush1.msra.mxu0 0.0
    %248 = vmatprep.subr.mxu0 0.0
    %249 = vmatpush1.msra.mxu0 0.0
    %250 = vmatprep.subr.mxu0 0.0
    %251 = vmatpush1.msra.mxu0 0.0
    %252 = vmatprep.subr.mxu0 0.0
    %253 = vmatpush1.msra.mxu0 0.0
    %254 = vmatprep.subr.mxu0 0.0
    %255 = vmatpush1.msra.mxu0 0.0
    %256 = vmatprep.subr.mxu0 0.0
    %257 = vmatpush1.msra.mxu0 0.0
    %258 = vmatprep.subr.mxu0 0.0
    %259 = vmatpush1.msra.mxu0 0.0
    %260 = vmatprep.subr.mxu0 0.0
    %261 = vmatpush1.msra.mxu0 0.0
    %262 = vmatprep.subr.mxu0 0.0
    %263 = vmatpush1.msra.mxu0 0.0
    %264 = vmatprep.subr.mxu0 0.0
    %265 = vmatpush1.msra.mxu0 0.0
    %266 = vmatprep.subr.mxu0 0.0
    %267 = vmatpush1.msra.mxu0 0.0
    %268 = vmatprep.subr.mxu0 0.0
    %269 = vmatpush1.msra.mxu0 0.0
    %270 = vmatprep.subr.mxu0 0.0
    %271 = vmatpush1.msra.mxu0 0.0
    %272 = vmatprep.subr.mxu0 0.0
    %273 = vmatpush1.msra.mxu0 0.0
    %274 = vmatprep.subr.mxu0 0.0
    %275 = vmatpush1.msra.mxu0 0.0
    %276 = vmatprep.subr.mxu0 0.0
    %277 = vmatpush1.msra.mxu0 0.0
    %278 = vmatprep.subr.mxu0 0.0
    %279 = vmatpush1.msra.mxu0 0.0
    %280 = vmatprep.subr.mxu0 0.0
    %281 = vmatpush1.msra.mxu0 0.0
    %282 = vmatprep.subr.mxu0 0.0
    %283 = vmatpush1.msra.mxu0 0.0
    %284 = vmatprep.subr.mxu0 0.0
    %285 = vmatpush1.msra.mxu0 0.0
    %286 = vmatprep.subr.mxu0 0.0
    %287 = vmatpush1.msra.mxu0 0.0
    %288 = vmatprep.subr.mxu0 0.0
    %289 = vmatpush1.msra.mxu0 0.0
    %290 = vmatprep.subr.mxu0 0.0
    %291 = vmatpush1.msra.mxu0 0.0
    %292 = vmatprep.subr.mxu0 0.0
    %293 = vmatpush1.msra.mxu0 0.0
    %294 = vmatprep.subr.mxu0 0.0
    %295 = vmatpush1.msra.mxu0 0.0
    %296 = vmatprep.subr.mxu0 0.0
    %297 = vmatpush1.msra.mxu0 0.0
    %298 = vmatprep.mubr.f32.mxu0 0.0
    %299 = vmatmul.mubr.f32.gmra.mrb[0].mxu0 %v229
    %v300 = vpop.f32.mrb[0].mxu0
    %v301 = vadd.f32 %v226, %v300
    %v302 = vpop.f32.mrb[0].mxu0
    %303 = vdwg.mxu0
    %304 = vst [vmem:[#allocation2] sm:$0x1] %v301
    // Predicated region
    $region22: #{tpu_custom_call.1} parent=1 // pred_check
      _
    $region23: #{tpu_custom_call.1} parent=1 // pred_check_branch
      %306 = sbr.rel (0) target = $region25
    $region24: #{tpu_custom_call.1} parent=1 // pred_region
      %s308 = ssub.s32 16, 16
      %309 = vsyncadd [#allocation3], %s308
      %s311 = sshll.u32 [#allocation2], 4
      %s312 = int_to_ptr.vmem [resolvable:$true] %s311
      %314 = dma.vmem_to_hbm [thread:$0]  %s312, 16, %s5, [#allocation3]
    $region25: #{tpu_custom_call.1} parent=1 // pred_fallthru
      _
    // Predicated region
    $region26: #{tpu_custom_call.1} parent=1 // pred_check
      _
    $region27: #{tpu_custom_call.1} parent=1 // pred_check_branch
      %316 = sbr.rel (0) target = $region29
    $region28: #{tpu_custom_call.1} parent=1 // pred_region
      %317 = dma.done [#allocation3], 16
    $region29: #{tpu_custom_call.1} parent=1 // pred_fallthru
      _
    %318 = vsyncpa [#allocation3], 1

</llo_original>
